<compile_context>
chip_gen: v7x
topology: tpu7x:2x2x1
jax: 0.10.0
libtpu: 0.0.40
codegen_flags: <defaults>
</compile_context>

<pallas_src>
import functools

import jax
import jax.numpy as jnp
from jax.experimental import pallas as pl
from jax.experimental.pallas import tpu as pltpu


# ---------------------------------------------------------------------------
# Helpers
# ---------------------------------------------------------------------------

def _l2_normalize(x):
    # torch.nn.functional.normalize(x, dim=1): x / max(||x||, 1e-12), written
    # as x * rsqrt(max(||x||^2, 1e-24)) so the rsqrt lands on the EUP slot.
    ss = jnp.sum(x * x, axis=1, keepdims=True)
    return x * jax.lax.rsqrt(jnp.maximum(ss, 1e-24))


def _vmem_budget():
    """(tile-sizing budget, scoped vmem limit) in bytes, generation-aware."""
    vmem_physical = 64 * 1024 * 1024          # conservative default (v7x size)
    try:
        vmem_physical = int(pltpu.get_tpu_info().vmem_capacity_bytes)
    except Exception:
        pass                                   # keep the conservative default
    budget = int(vmem_physical * 0.65)         # headroom for compiler scratch
    limit = int(vmem_physical * 0.85)
    return budget, limit


_TILE_CANDIDATES = (1024, 512, 256, 128)


def _norm_tile(n, c, eb, budget):
    """Row tile for the normalization prologue (pure streaming pass)."""
    if n < 128:
        return n
    for t in _TILE_CANDIDATES:
        if n % t == 0 and 8 * t * c * (4 + eb) <= budget:
            return t
    return n  # ragged / huge-C fallback: single full-rows block, best effort


def _fast_path_tile(n, c, eb, budget, max_tile):
    """Query-tile size for the keys-resident path, or None if keys don't fit."""
    keys_bytes = 4 * n * c * eb                # 2 key arrays x 2 buffers

    def fits(t):
        q_bytes = 4 * t * c * eb               # 2 q arrays x 2 buffers
        slab_bytes = 8 * t * n * 4             # 2 (T, N) f32 logits + temporaries
        return keys_bytes + q_bytes + slab_bytes <= budget

    if n < 128:
        return n if (n <= max_tile and fits(n)) else None
    for t in _TILE_CANDIDATES:
        if t <= max_tile and n % t == 0 and fits(t):
            return t
    return None


def _tiled_tile(n, c, eb, budget, max_tile):
    """Tile size for the streaming online-LSE path."""
    def step_bytes(t):
        # 4 streamed (T, C) tiles x 2 buffers, 2 (T, T) f32 logits + temps,
        # 6 (T, 1) f32 scratch arrays (lane-padded to 128).
        return 8 * t * c * eb + 8 * t * t * 4 + 6 * t * 128 * 4

    if n < 128:
        return n
    cands = [t for t in _TILE_CANDIDATES if t <= max_tile and n % t == 0]
    if not cands:
        # TODO(synk): pad ragged N up to a multiple of 128 (masking the padded
        # logit rows/cols) instead of falling back to a single huge tile.
        return n
    for t in cands:
        if step_bytes(t) <= budget:
            return t
    return cands[-1]


# ---------------------------------------------------------------------------
# Kernels
# ---------------------------------------------------------------------------

def _normalize_kernel(inv_temp_ref,                        # (1,) f32 in SMEM
                      q1_ref, q2_ref, k1_ref, k2_ref,      # (T, C) input tiles
                      q1o_ref, q2o_ref, k1o_ref, k2o_ref): # (T, C) output tiles
    """L2-normalize; fold 1/temperature into queries; cast to matmul dtype."""
    inv_temp = inv_temp_ref[0]
    q1o_ref[...] = (_l2_normalize(q1_ref[...].astype(jnp.float32)) * inv_temp
                    ).astype(q1o_ref.dtype)
    q2o_ref[...] = (_l2_normalize(q2_ref[...].astype(jnp.float32)) * inv_temp
                    ).astype(q2o_ref.dtype)
    k1o_ref[...] = _l2_normalize(k1_ref[...].astype(jnp.float32)
                                 ).astype(k1o_ref.dtype)
    k2o_ref[...] = _l2_normalize(k2_ref[...].astype(jnp.float32)
                                 ).astype(k2o_ref.dtype)


def _resident_kernel(q1_ref, q2_ref,          # (T, C) query tiles (normalized)
                     k1_ref, k2_ref,          # (N, C) resident keys (normalized)
                     o_ref,                   # (1, 1, 128) partial loss
                     *, n_total, tile_q):
    """Keys-resident fast path: plain softmax per query tile."""
    i = pl.program_id(0)
    dn = (((1,), (1,)), ((), ()))             # 'nc,mc->nm' (no key transpose)
    s_a = jax.lax.dot_general(q1_ref[...], k2_ref[...], dn,
                              preferred_element_type=jnp.float32)   # (T, N)
    s_b = jax.lax.dot_general(q2_ref[...], k1_ref[...], dn,
                              preferred_element_type=jnp.float32)

    # Positive logit of global row (i*T + r) is column (i*T + r).
    row = jax.lax.broadcasted_iota(jnp.int32, s_a.shape, 0)
    col = jax.lax.broadcasted_iota(jnp.int32, s_a.shape, 1)
    pos = col == (row + i * tile_q)

    def _term_loss(s):
        m = jnp.max(s, axis=1, keepdims=True)
        lse = m + jnp.log(jnp.sum(jnp.exp(s - m), axis=1, keepdims=True))
        d = jnp.sum(jnp.where(pos, s, 0.0), axis=1, keepdims=True)
        return lse - d

    per_row = _term_loss(s_a) + _term_loss(s_b)
    partial = jnp.sum(per_row) * (1.0 / n_total)
    lanes = jax.lax.broadcasted_iota(jnp.int32, (1, 1, 128), 2)
    o_ref[...] = jnp.where(lanes == 0, partial, 0.0)


def _tiled_kernel(q1_ref, q2_ref, k1_ref, k2_ref,   # (T, C) normalized tiles
                  o_ref,                            # (1, 1, 128) partial loss
                  m_a, l_a, d_a, m_b, l_b, d_b,     # (T, 1) f32 scratch
                  *, n_total):
    """Streaming fallback: online log-sum-exp over key tiles."""
    i = pl.program_id(0)           # query tile index (parallel axis)
    j = pl.program_id(1)           # key tile index   (innermost reduction)
    nk = pl.num_programs(1)

    @pl.when(j == 0)
    def _init():
        m_a[...] = jnp.full_like(m_a, -jnp.inf)
        m_b[...] = jnp.full_like(m_b, -jnp.inf)
        l_a[...] = jnp.zeros_like(l_a)
        l_b[...] = jnp.zeros_like(l_b)

    dn = (((1,), (1,)), ((), ()))
    s_a = jax.lax.dot_general(q1_ref[...], k2_ref[...], dn,
                              preferred_element_type=jnp.float32)   # (T, T)
    s_b = jax.lax.dot_general(q2_ref[...], k1_ref[...], dn,
                              preferred_element_type=jnp.float32)

    def _online_lse(m_ref, l_ref, s):
        m_new = jnp.maximum(m_ref[...], jnp.max(s, axis=1, keepdims=True))
        alpha = jnp.exp(m_ref[...] - m_new)
        l_ref[...] = alpha * l_ref[...] + jnp.sum(jnp.exp(s - m_new), axis=1,
                                                  keepdims=True)
        m_ref[...] = m_new

    _online_lse(m_a, l_a, s_a)
    _online_lse(m_b, l_b, s_b)

    # Positive logits (labels = arange(N)): with square tiles the diagonal
    # block is j == i; take the tile diagonal from the matmul result so it is
    # numerically consistent with the logits inside the log-sum-exp.
    @pl.when(j == i)
    def _diag():
        row = jax.lax.broadcasted_iota(jnp.int32, s_a.shape, 0)
        col = jax.lax.broadcasted_iota(jnp.int32, s_a.shape, 1)
        mask = row == col
        d_a[...] = jnp.sum(jnp.where(mask, s_a, 0.0), axis=1, keepdims=True)
        d_b[...] = jnp.sum(jnp.where(mask, s_b, 0.0), axis=1, keepdims=True)

    @pl.when(j == nk - 1)
    def _finalize():
        per_row = (m_a[...] + jnp.log(l_a[...]) - d_a[...]
                   + m_b[...] + jnp.log(l_b[...]) - d_b[...])
        partial = jnp.sum(per_row) * (1.0 / n_total)
        lanes = jax.lax.broadcasted_iota(jnp.int32, (1, 1, 128), 2)
        o_ref[...] = jnp.where(lanes == 0, partial, 0.0)


# ---------------------------------------------------------------------------
# Wrappers
# ---------------------------------------------------------------------------

def _run_normalize(q1, q2, k1, k2, inv_temp, out_dtype, budget, limit):
    n, c = q1.shape
    eb = jnp.dtype(out_dtype).itemsize
    t = _norm_tile(n, c, eb, budget)
    spec = pl.BlockSpec((t, c), lambda i: (i, 0))
    smem_spec = pl.BlockSpec(memory_space=pltpu.MemorySpace.SMEM)
    out_sds = jax.ShapeDtypeStruct((n, c), out_dtype)
    return pl.pallas_call(
        _normalize_kernel,
        out_shape=(out_sds, out_sds, out_sds, out_sds),
        grid_spec=pltpu.PrefetchScalarGridSpec(
            num_scalar_prefetch=0,
            grid=(n // t,),
            in_specs=[smem_spec, spec, spec, spec, spec],
            out_specs=[spec, spec, spec, spec],
        ),
        compiler_params=pltpu.CompilerParams(
            dimension_semantics=("parallel",),
            vmem_limit_bytes=limit,
        ),
    )(inv_temp, q1, q2, k1, k2)


def _resident_loss(q1n, q2n, k1n, k2n, t, limit):
    n, c = q1n.shape
    n_tiles = n // t
    kernel = functools.partial(_resident_kernel, n_total=n, tile_q=t)
    q_spec = pl.BlockSpec((t, c), lambda i: (i, 0))
    k_spec = pl.BlockSpec((n, c), lambda i: (0, 0))   # constant -> resident
    partials = pl.pallas_call(
        kernel,
        out_shape=jax.ShapeDtypeStruct((n_tiles, 1, 128), jnp.float32),
        grid_spec=pltpu.PrefetchScalarGridSpec(
            num_scalar_prefetch=0,
            grid=(n_tiles,),
            in_specs=[q_spec, q_spec, k_spec, k_spec],
            out_specs=pl.BlockSpec((1, 1, 128), lambda i: (i, 0, 0)),
        ),
        compiler_params=pltpu.CompilerParams(
            dimension_semantics=("parallel",),
            vmem_limit_bytes=limit,
        ),
    )(q1n, q2n, k1n, k2n)
    return jnp.sum(partials)


def _tiled_loss(q1n, q2n, k1n, k2n, t, limit):
    n, c = q1n.shape
    n_tiles = n // t
    kernel = functools.partial(_tiled_kernel, n_total=n)
    q_spec = pl.BlockSpec((t, c), lambda i, j: (i, 0))
    # TODO(synk): if xprof shows exposed key DMA, add pipeline_mode=pl.Buffered(3).
    k_spec = pl.BlockSpec((t, c), lambda i, j: (j, 0))
    partials = pl.pallas_call(
        kernel,
        out_shape=jax.ShapeDtypeStruct((n_tiles, 1, 128), jnp.float32),
        grid_spec=pltpu.PrefetchScalarGridSpec(
            num_scalar_prefetch=0,
            grid=(n_tiles, n_tiles),
            in_specs=[q_spec, q_spec, k_spec, k_spec],
            out_specs=pl.BlockSpec((1, 1, 128), lambda i, j: (i, 0, 0)),
            scratch_shapes=[pltpu.VMEM((t, 1), jnp.float32)] * 6,
        ),
        compiler_params=pltpu.CompilerParams(
            # TODO(synk): evaluate pltpu.CORE_PARALLEL on the query axis for v7x.
            dimension_semantics=("parallel", "arbitrary"),
            vmem_limit_bytes=limit,
        ),
    )(q1n, q2n, k1n, k2n)
    return jnp.sum(partials)


def moco_v3_nce_loss(q1, q2, k1, k2, temperature=0.07,
                     matmul_dtype=jnp.bfloat16,
                     max_tile=1024, force_tiled=False):
    """loss = infonce(q1, k2) + infonce(q2, k1) with arange(N) labels."""
    n, c = q1.shape
    eb = jnp.dtype(matmul_dtype).itemsize
    budget, limit = _vmem_budget()

    inv_temp = jnp.full((1,), 1.0 / float(temperature), dtype=jnp.float32)
    # Prologue: normalize once, fold 1/temperature into q, cast to matmul dtype.
    q1n, q2n, k1n, k2n = _run_normalize(q1, q2, k1, k2, inv_temp,
                                        matmul_dtype, budget, limit)

    if not force_tiled:
        t_fast = _fast_path_tile(n, c, eb, budget, max_tile)
        if t_fast is not None:
            return _resident_loss(q1n, q2n, k1n, k2n, t_fast, limit)

    t = _tiled_tile(n, c, eb, budget, max_tile)
    return _tiled_loss(q1n, q2n, k1n, k2n, t, limit)


# ---------------------------------------------------------------------------
# Reference + tests
# ---------------------------------------------------------------------------

def _reference(q1, q2, k1, k2, temperature=0.07):
    def infonce(q, k):
        qn = q / jnp.maximum(jnp.linalg.norm(q, axis=1, keepdims=True), 1e-12)
        kn = k / jnp.maximum(jnp.linalg.norm(k, axis=1, keepdims=True), 1e-12)
        logits = (qn @ kn.T) / temperature
        n = logits.shape[0]
        logp = jax.nn.log_softmax(logits, axis=1)
        return -jnp.mean(logp[jnp.arange(n), jnp.arange(n)])
    return infonce(q1, k2) + infonce(q2, k1)


if __name__ == "__main__":
    temperature = 0.07  # config['temperature']

    # Small shapes consistent with the module: batch N=8, feature dim C=32.
    kq1, kq2, kk1, kk2 = jax.random.split(jax.random.PRNGKey(0), 4)
    q1 = jax.random.normal(kq1, (8, 32), dtype=jnp.float32)
    q2 = jax.random.normal(kq2, (8, 32), dtype=jnp.float32)
    k1 = jax.random.normal(kk1, (8, 32), dtype=jnp.float32)
    k2 = jax.random.normal(kk2, (8, 32), dtype=jnp.float32)

    ref = _reference(q1, q2, k1, k2, temperature)
    loss = jax.block_until_ready(
        moco_v3_nce_loss(q1, q2, k1, k2, temperature, matmul_dtype=jnp.float32))
    assert jnp.allclose(loss, ref, rtol=1e-4, atol=1e-4), (loss, ref)

    # Bigger batch: N=512, C=64.
    kq1, kq2, kk1, kk2 = jax.random.split(jax.random.PRNGKey(1), 4)
    q1b = jax.random.normal(kq1, (512, 64), dtype=jnp.float32)
    q2b = jax.random.normal(kq2, (512, 64), dtype=jnp.float32)
    k1b = jax.random.normal(kk1, (512, 64), dtype=jnp.float32)
    k2b = jax.random.normal(kk2, (512, 64), dtype=jnp.float32)
    ref_b = _reference(q1b, q2b, k1b, k2b, temperature)

    # (a) keys-resident fast path, f32 matmuls.
    loss_f32 = jax.block_until_ready(
        moco_v3_nce_loss(q1b, q2b, k1b, k2b, temperature,
                         matmul_dtype=jnp.float32))
    assert jnp.allclose(loss_f32, ref_b, rtol=1e-4, atol=1e-4), (loss_f32, ref_b)

    # (b) default bf16 MXU path (looser tolerance: bf16-rounded logits).
    loss_bf16 = jax.block_until_ready(
        moco_v3_nce_loss(q1b, q2b, k1b, k2b, temperature))
    assert jnp.allclose(loss_bf16, ref_b, rtol=2e-2, atol=2e-2), (loss_bf16, ref_b)

    # (c) forced streaming online-LSE path (4x4 grid of 128-row tiles), f32.
    loss_tiled = jax.block_until_ready(
        moco_v3_nce_loss(q1b, q2b, k1b, k2b, temperature,
                         matmul_dtype=jnp.float32, max_tile=128,
                         force_tiled=True))
    assert jnp.allclose(loss_tiled, ref_b, rtol=1e-4, atol=1e-4), (loss_tiled, ref_b)

    # (d) forced streaming path with the default bf16 matmuls.
    loss_tiled_bf16 = jax.block_until_ready(
        moco_v3_nce_loss(q1b, q2b, k1b, k2b, temperature,
                         max_tile=128, force_tiled=True))
    assert jnp.allclose(loss_tiled_bf16, ref_b, rtol=2e-2, atol=2e-2), (
        loss_tiled_bf16, ref_b)

    print("KERNEL_OK")
</pallas_src>

<mosaic_0001>
module attributes {stable_mosaic.version = 11 : i64} {
  func.func @_normalize_kernel(%arg0: i32, %arg1: memref<1xf32, #tpu.memory_space<smem>>, %arg2: memref<8x32xf32, #tpu.memory_space<vmem>>, %arg3: memref<8x32xf32, #tpu.memory_space<vmem>>, %arg4: memref<8x32xf32, #tpu.memory_space<vmem>>, %arg5: memref<8x32xf32, #tpu.memory_space<vmem>>, %arg6: memref<8x32xf32, #tpu.memory_space<vmem>>, %arg7: memref<8x32xf32, #tpu.memory_space<vmem>>, %arg8: memref<8x32xf32, #tpu.memory_space<vmem>>, %arg9: memref<8x32xf32, #tpu.memory_space<vmem>>) attributes {dimension_semantics = [#tpu.dimension_semantics<parallel>], iteration_bounds = array<i64: 1>, scalar_prefetch = 0 : i64, scratch_operands = 0 : i64, tpu.core_type = #tpu.core_type<tc>, window_params = [{transform_indices = @transform_0, window_bounds = array<i64: 1>}, {transform_indices = @transform_1, window_bounds = array<i64: 8, 32>}, {transform_indices = @transform_2, window_bounds = array<i64: 8, 32>}, {transform_indices = @transform_3, window_bounds = array<i64: 8, 32>}, {transform_indices = @transform_4, window_bounds = array<i64: 8, 32>}, {transform_indices = @transform_5, window_bounds = array<i64: 8, 32>}, {transform_indices = @transform_6, window_bounds = array<i64: 8, 32>}, {transform_indices = @transform_7, window_bounds = array<i64: 8, 32>}, {transform_indices = @transform_8, window_bounds = array<i64: 8, 32>}]} {
    %c0 = arith.constant 0 : index
    %0 = memref.load %arg1[%c0] : memref<1xf32, #tpu.memory_space<smem>>
    %c0_0 = arith.constant 0 : index
    %c0_1 = arith.constant 0 : index
    %1 = vector.load %arg2[%c0_0, %c0_1] : memref<8x32xf32, #tpu.memory_space<vmem>>, vector<8x32xf32>
    %2 = arith.mulf %1, %1 : vector<8x32xf32>
    %cst = arith.constant dense<0.000000e+00> : vector<8xf32>
    %3 = vector.multi_reduction <add>, %2, %cst [1] : vector<8x32xf32> to vector<8xf32>
    %4 = vector.shape_cast %3 : vector<8xf32> to vector<8x1xf32>
    %cst_2 = arith.constant 1.000000e-24 : f32
    %5 = vector.broadcast %cst_2 : f32 to vector<8x1xf32>
    %6 = arith.maximumf %4, %5 : vector<8x1xf32>
    %7 = math.rsqrt %6 : vector<8x1xf32>
    %8 = vector.broadcast %7 : vector<8x1xf32> to vector<8x32xf32>
    %9 = arith.mulf %1, %8 : vector<8x32xf32>
    %10 = vector.broadcast %0 : f32 to vector<8x32xf32>
    %11 = arith.mulf %9, %10 : vector<8x32xf32>
    %c0_3 = arith.constant 0 : index
    %c0_4 = arith.constant 0 : index
    %12 = vector.load %arg6[%c0_3, %c0_4] : memref<8x32xf32, #tpu.memory_space<vmem>>, vector<8x32xf32>
    tpu.vector_store %arg6[%c0_3, %c0_4], %11 {strides = array<i32>} : memref<8x32xf32, #tpu.memory_space<vmem>>, vector<8x32xf32>,
    %c0_5 = arith.constant 0 : index
    %c0_6 = arith.constant 0 : index
    %13 = vector.load %arg3[%c0_5, %c0_6] : memref<8x32xf32, #tpu.memory_space<vmem>>, vector<8x32xf32>
    %14 = arith.mulf %13, %13 : vector<8x32xf32>
    %cst_7 = arith.constant dense<0.000000e+00> : vector<8xf32>
    %15 = vector.multi_reduction <add>, %14, %cst_7 [1] : vector<8x32xf32> to vector<8xf32>
    %16 = vector.shape_cast %15 : vector<8xf32> to vector<8x1xf32>
    %cst_8 = arith.constant 1.000000e-24 : f32
    %17 = vector.broadcast %cst_8 : f32 to vector<8x1xf32>
    %18 = arith.maximumf %16, %17 : vector<8x1xf32>
    %19 = math.rsqrt %18 : vector<8x1xf32>
    %20 = vector.broadcast %19 : vector<8x1xf32> to vector<8x32xf32>
    %21 = arith.mulf %13, %20 : vector<8x32xf32>
    %22 = vector.broadcast %0 : f32 to vector<8x32xf32>
    %23 = arith.mulf %21, %22 : vector<8x32xf32>
    %c0_9 = arith.constant 0 : index
    %c0_10 = arith.constant 0 : index
    %24 = vector.load %arg7[%c0_9, %c0_10] : memref<8x32xf32, #tpu.memory_space<vmem>>, vector<8x32xf32>
    tpu.vector_store %arg7[%c0_9, %c0_10], %23 {strides = array<i32>} : memref<8x32xf32, #tpu.memory_space<vmem>>, vector<8x32xf32>,
    %c0_11 = arith.constant 0 : index
    %c0_12 = arith.constant 0 : index
    %25 = vector.load %arg4[%c0_11, %c0_12] : memref<8x32xf32, #tpu.memory_space<vmem>>, vector<8x32xf32>
    %26 = arith.mulf %25, %25 : vector<8x32xf32>
    %cst_13 = arith.constant dense<0.000000e+00> : vector<8xf32>
    %27 = vector.multi_reduction <add>, %26, %cst_13 [1] : vector<8x32xf32> to vector<8xf32>
    %28 = vector.shape_cast %27 : vector<8xf32> to vector<8x1xf32>
    %cst_14 = arith.constant 1.000000e-24 : f32
    %29 = vector.broadcast %cst_14 : f32 to vector<8x1xf32>
    %30 = arith.maximumf %28, %29 : vector<8x1xf32>
    %31 = math.rsqrt %30 : vector<8x1xf32>
    %32 = vector.broadcast %31 : vector<8x1xf32> to vector<8x32xf32>
    %33 = arith.mulf %25, %32 : vector<8x32xf32>
    %c0_15 = arith.constant 0 : index
    %c0_16 = arith.constant 0 : index
    %34 = vector.load %arg8[%c0_15, %c0_16] : memref<8x32xf32, #tpu.memory_space<vmem>>, vector<8x32xf32>
    tpu.vector_store %arg8[%c0_15, %c0_16], %33 {strides = array<i32>} : memref<8x32xf32, #tpu.memory_space<vmem>>, vector<8x32xf32>,
    %c0_17 = arith.constant 0 : index
    %c0_18 = arith.constant 0 : index
    %35 = vector.load %arg5[%c0_17, %c0_18] : memref<8x32xf32, #tpu.memory_space<vmem>>, vector<8x32xf32>
    %36 = arith.mulf %35, %35 : vector<8x32xf32>
    %cst_19 = arith.constant dense<0.000000e+00> : vector<8xf32>
    %37 = vector.multi_reduction <add>, %36, %cst_19 [1] : vector<8x32xf32> to vector<8xf32>
    %38 = vector.shape_cast %37 : vector<8xf32> to vector<8x1xf32>
    %cst_20 = arith.constant 1.000000e-24 : f32
    %39 = vector.broadcast %cst_20 : f32 to vector<8x1xf32>
    %40 = arith.maximumf %38, %39 : vector<8x1xf32>
    %41 = math.rsqrt %40 : vector<8x1xf32>
    %42 = vector.broadcast %41 : vector<8x1xf32> to vector<8x32xf32>
    %43 = arith.mulf %35, %42 : vector<8x32xf32>
    %c0_21 = arith.constant 0 : index
    %c0_22 = arith.constant 0 : index
    %44 = vector.load %arg9[%c0_21, %c0_22] : memref<8x32xf32, #tpu.memory_space<vmem>>, vector<8x32xf32>
    tpu.vector_store %arg9[%c0_21, %c0_22], %43 {strides = array<i32>} : memref<8x32xf32, #tpu.memory_space<vmem>>, vector<8x32xf32>,
    return
  }
  func.func @transform_0(%arg0: i32) -> i32 {
    %c0_i32 = arith.constant 0 : i32
    %c0_i32_0 = arith.constant 0 : i32
    return %c0_i32 : i32
  }
  func.func @transform_1(%arg0: i32) -> (i32, i32) {
    %c0_i32 = arith.constant 0 : i32
    %c0_i32_0 = arith.constant 0 : i32
    return %arg0, %c0_i32 : i32, i32
  }
  func.func @transform_2(%arg0: i32) -> (i32, i32) {
    %c0_i32 = arith.constant 0 : i32
    %c0_i32_0 = arith.constant 0 : i32
    return %arg0, %c0_i32 : i32, i32
  }
  func.func @transform_3(%arg0: i32) -> (i32, i32) {
    %c0_i32 = arith.constant 0 : i32
    %c0_i32_0 = arith.constant 0 : i32
    return %arg0, %c0_i32 : i32, i32
  }
  func.func @transform_4(%arg0: i32) -> (i32, i32) {
    %c0_i32 = arith.constant 0 : i32
    %c0_i32_0 = arith.constant 0 : i32
    return %arg0, %c0_i32 : i32, i32
  }
  func.func @transform_5(%arg0: i32) -> (i32, i32) {
    %c0_i32 = arith.constant 0 : i32
    %c0_i32_0 = arith.constant 0 : i32
    return %arg0, %c0_i32 : i32, i32
  }
  func.func @transform_6(%arg0: i32) -> (i32, i32) {
    %c0_i32 = arith.constant 0 : i32
    %c0_i32_0 = arith.constant 0 : i32
    return %arg0, %c0_i32 : i32, i32
  }
  func.func @transform_7(%arg0: i32) -> (i32, i32) {
    %c0_i32 = arith.constant 0 : i32
    %c0_i32_0 = arith.constant 0 : i32
    return %arg0, %c0_i32 : i32, i32
  }
  func.func @transform_8(%arg0: i32) -> (i32, i32) {
    %c0_i32 = arith.constant 0 : i32
    %c0_i32_0 = arith.constant 0 : i32
    return %arg0, %c0_i32 : i32, i32
  }
}

</mosaic_0001>

<llo_original>
// kernel: tpu_custom_call.1
$region0: #{tpu_custom_call.1}
  #allocation0 [shape = 'u32[]', space=smem, size = 0x4, offset = 0x4, fixed_abs, tag = 'smem constant byte address 0x4 - core index']
  #allocation1 [shape = 'u32[144,128]{1,0:T(1,128)}', space=vmem, size = 0x12000, scoped, tag = 'internal scratch']
  #allocation2 [shape = 'f32[1]{0:T(128)S(6)}', space=smem, size = 0x200, scoped, tag = 'scoped memory for tpu_custom_call.1']
  %s0 = inlined_call_operand.<no memory space> [shape: f32[1], index: 0, kind: input, shape index: {}]
  %s1 = inlined_call_operand.hbm [shape: f32[8,32], index: 1, kind: input, shape index: {}]
  %s2 = inlined_call_operand.hbm [shape: f32[8,32], index: 2, kind: input, shape index: {}]
  %s3 = inlined_call_operand.vmem [shape: f32[8,32], index: 3, kind: input, shape index: {}]
  %s4 = inlined_call_operand.hbm [shape: f32[8,32], index: 4, kind: input, shape index: {}]
  %s5 = inlined_call_operand.hbm [shape: f32[8,32], index: 5, kind: output, shape index: {0}]
  %s6 = inlined_call_operand.hbm [shape: f32[8,32], index: 6, kind: output, shape index: {1}]
  %s7 = inlined_call_operand.hbm [shape: f32[8,32], index: 7, kind: output, shape index: {2}]
  %s8 = inlined_call_operand.hbm [shape: f32[8,32], index: 8, kind: output, shape index: {3}]
  %9 = xla_tuple %s5, %s6, %s7, %s8
  %s10 = sld [smem:[#allocation0]]
  $region66: #{tpu_custom_call.1} parent=0
    _
  %s12 = ssub.s32 1, %s10
  %s13 = scalar_select 0, %s12, %s10
  %14 = sst [smem:[#allocation2]] %s0
  $region1: #{tpu_custom_call.1} parent=0
    #allocation3 [shape = 'u8[4096]{0}', space=vmem, size = 0x1000, scoped, tag = 'input window, operand 1, single buffered']
    #allocation4 [shape = 's32[1]{0}', space=sflag, size = 0x4, scoped, tag = 'scoped memory for tpu_custom_call.1']
    #allocation5 [shape = 's32[1]{0}', space=sflag, size = 0x4, scoped, tag = 'scoped memory for tpu_custom_call.1']
    #allocation6 [shape = 'u8[4096]{0}', space=vmem, size = 0x1000, scoped, tag = 'input window, operand 2, single buffered']
    #allocation7 [shape = 's32[1]{0}', space=sflag, size = 0x4, scoped, tag = 'scoped memory for tpu_custom_call.1']
    #allocation8 [shape = 'u8[4096]{0}', space=vmem, size = 0x1000, scoped, tag = 'input window, operand 4, single buffered']
    #allocation9 [shape = 'u8[4096]{0}', space=vmem, size = 0x1000, scoped, tag = 'output window, operand 0, single buffered']
    #allocation10 [shape = 'u8[4096]{0}', space=vmem, size = 0x1000, scoped, tag = 'output window, operand 1, single buffered']
    #allocation11 [shape = 's32[1]{0}', space=sflag, size = 0x4, scoped, tag = 'scoped memory for tpu_custom_call.1']
    #allocation12 [shape = 'u8[4096]{0}', space=vmem, size = 0x1000, scoped, tag = 'output window, operand 2, single buffered']
    #allocation13 [shape = 'u8[4096]{0}', space=vmem, size = 0x1000, scoped, tag = 'output window, operand 3, single buffered']
    #allocation14 [shape = 's32[1]{0}', space=sflag, size = 0x4, scoped, tag = 'scoped memory for tpu_custom_call.1']
    %15 = vsyncpa [#allocation4], 0
    %16 = vsyncpa [#allocation7], 0
    %17 = vsyncpa [#allocation5], 0
    %18 = vsyncpa [#allocation11], 0
    %19 = vsyncpa [#allocation14], 0
    // Predicated region
    $region2: #{tpu_custom_call.1} parent=1 // pred_check
      _
    $region3: #{tpu_custom_call.1} parent=1 // pred_check_branch
      %21 = sbr.rel (0) target = $region5
    $region4: #{tpu_custom_call.1} parent=1 // pred_region
      _
    $region5: #{tpu_custom_call.1} parent=1 // pred_fallthru
      _
    // Predicated region
    $region6: #{tpu_custom_call.1} parent=1 // pred_check
      _
    $region7: #{tpu_custom_call.1} parent=1 // pred_check_branch
      %23 = sbr.rel (0) target = $region9
    $region8: #{tpu_custom_call.1} parent=1 // pred_region
      %s25 = ssub.s32 128, 128
      %26 = vsyncadd [#allocation4], %s25
      %s28 = sshll.u32 [#allocation3], 4
      %s29 = int_to_ptr.vmem [resolvable:$true] %s28
      %31 = dma.hbm_to_vmem [thread:$0]  %s1, 128, %s29, [#allocation4]
    $region9: #{tpu_custom_call.1} parent=1 // pred_fallthru
      _
    // Predicated region
    $region10: #{tpu_custom_call.1} parent=1 // pred_check
      _
    $region11: #{tpu_custom_call.1} parent=1 // pred_check_branch
      %33 = sbr.rel (0) target = $region13
    $region12: #{tpu_custom_call.1} parent=1 // pred_region
      %s35 = ssub.s32 128, 128
      %36 = vsyncadd [#allocation7], %s35
      %s38 = sshll.u32 [#allocation6], 4
      %s39 = int_to_ptr.vmem [resolvable:$true] %s38
      %41 = dma.hbm_to_vmem [thread:$0]  %s2, 128, %s39, [#allocation7]
    $region13: #{tpu_custom_call.1} parent=1 // pred_fallthru
      _
    // Predicated region
    $region14: #{tpu_custom_call.1} parent=1 // pred_check
      _
    $region15: #{tpu_custom_call.1} parent=1 // pred_check_branch
      %43 = sbr.rel (0) target = $region17
    $region16: #{tpu_custom_call.1} parent=1 // pred_region
      _
    $region17: #{tpu_custom_call.1} parent=1 // pred_fallthru
      _
    // Predicated region
    $region18: #{tpu_custom_call.1} parent=1 // pred_check
      _
    $region19: #{tpu_custom_call.1} parent=1 // pred_check_branch
      %45 = sbr.rel (0) target = $region21
    $region20: #{tpu_custom_call.1} parent=1 // pred_region
      %s47 = ssub.s32 128, 128
      %48 = vsyncadd [#allocation7], %s47
      %s50 = sshll.u32 [#allocation8], 4
      %s51 = int_to_ptr.vmem [resolvable:$true] %s50
      %53 = dma.hbm_to_vmem [thread:$0]  %s4, 128, %s51, [#allocation7]
    $region21: #{tpu_custom_call.1} parent=1 // pred_fallthru
      _
    // Predicated region
    $region22: #{tpu_custom_call.1} parent=1 // pred_check
      _
    $region23: #{tpu_custom_call.1} parent=1 // pred_check_branch
      %55 = sbr.rel (0) target = $region25
    $region24: #{tpu_custom_call.1} parent=1 // pred_region
      %56 = dma.done [#allocation4], 128
    $region25: #{tpu_custom_call.1} parent=1 // pred_fallthru
      _
    // Predicated region
    $region26: #{tpu_custom_call.1} parent=1 // pred_check
      _
    $region27: #{tpu_custom_call.1} parent=1 // pred_check_branch
      %58 = sbr.rel (0) target = $region29
    $region28: #{tpu_custom_call.1} parent=1 // pred_region
      %59 = dma.done [#allocation7], 128
    $region29: #{tpu_custom_call.1} parent=1 // pred_fallthru
      _
    // Predicated region
    $region30: #{tpu_custom_call.1} parent=1 // pred_check
      _
    $region31: #{tpu_custom_call.1} parent=1 // pred_check_branch
      %61 = sbr.rel (0) target = $region33
    $region32: #{tpu_custom_call.1} parent=1 // pred_region
      %62 = dma.done [#allocation7], 128
    $region33: #{tpu_custom_call.1} parent=1 // pred_fallthru
      _
    %s63 = sld [smem:[#allocation2]]
    %v64 = vld [vmem:[#allocation3] sm:$0xff]
    %v65 = vmul.f32 %v64, %v64
    %vm66 = vcmask 261120
    %v67 = vsel %vm66, %v65, 0.0
    %68 = vadd.xlane.f32.xlu0 %v67
    %v69 = vpop.xlane.xlu0 %68
    %v70 = vmax.f32 %v69, 1e-24
    %v71 = vrsqrt.pop %v70
    %v72 = vmul.f32 %v64, %v71
    %v73 = vstv %s63
    %v74 = vmul.f32 %v72, %v73
    %75 = vst.msk [vmem:[#allocation9] sm:$0xff] %vm66, %v74
    %v76 = vld [vmem:[#allocation6] sm:$0xff]
    %v77 = vmul.f32 %v76, %v76
    %v78 = vsel %vm66, %v77, 0.0
    %79 = vadd.xlane.f32.xlu0 %v78
    %v80 = vpop.xlane.xlu0 %79
    %v81 = vmax.f32 %v80, 1e-24
    %v82 = vrsqrt.pop %v81
    %v83 = vmul.f32 %v76, %v82
    %v84 = vmul.f32 %v83, %v73
    %85 = vst.msk [vmem:[#allocation10] sm:$0xff] %vm66, %v84
    %v86 = vld [vmem:[%s3] sm:$0xff]
    %v87 = vmul.f32 %v86, %v86
    %v88 = vsel %vm66, %v87, 0.0
    %89 = vadd.xlane.f32.xlu0 %v88
    %v90 = vpop.xlane.xlu0 %89
    %v91 = vmax.f32 %v90, 1e-24
    %v92 = vrsqrt.pop %v91
    %v93 = vmul.f32 %v86, %v92
    %94 = vst.msk [vmem:[#allocation12] sm:$0xff] %vm66, %v93
    %v95 = vld [vmem:[#allocation8] sm:$0xff]
    %v96 = vmul.f32 %v95, %v95
    %v97 = vsel %vm66, %v96, 0.0
    %98 = vadd.xlane.f32.xlu0 %v97
    %v99 = vpop.xlane.xlu0 %98
    %v100 = vmax.f32 %v99, 1e-24
    %v101 = vrsqrt.pop %v100
    %v102 = vmul.f32 %v95, %v101
    %103 = vst.msk [vmem:[#allocation13] sm:$0xff] %vm66, %v102
    // Predicated region
    $region34: #{tpu_custom_call.1} parent=1 // pred_check
      _
    $region35: #{tpu_custom_call.1} parent=1 // pred_check_branch
      %105 = sbr.rel (0) target = $region37
    $region36: #{tpu_custom_call.1} parent=1 // pred_region
      %s107 = ssub.s32 128, 128
      %108 = vsyncadd [#allocation5], %s107
      %s110 = sshll.u32 [#allocation9], 4
      %s111 = int_to_ptr.vmem [resolvable:$true] %s110
      %113 = dma.vmem_to_hbm [thread:$0]  %s111, 128, %s5, [#allocation5]
    $region37: #{tpu_custom_call.1} parent=1 // pred_fallthru
      _
    // Predicated region
    $region38: #{tpu_custom_call.1} parent=1 // pred_check
      _
    $region39: #{tpu_custom_call.1} parent=1 // pred_check_branch
      %115 = sbr.rel (0) target = $region41
    $region40: #{tpu_custom_call.1} parent=1 // pred_region
      %s117 = ssub.s32 128, 128
      %118 = vsyncadd [#allocation11], %s117
      %s120 = sshll.u32 [#allocation10], 4
      %s121 = int_to_ptr.vmem [resolvable:$true] %s120
      %123 = dma.vmem_to_hbm [thread:$0]  %s121, 128, %s6, [#allocation11]
    $region41: #{tpu_custom_call.1} parent=1 // pred_fallthru
      _
    // Predicated region
    $region42: #{tpu_custom_call.1} parent=1 // pred_check
      _
    $region43: #{tpu_custom_call.1} parent=1 // pred_check_branch
      %125 = sbr.rel (0) target = $region45
    $region44: #{tpu_custom_call.1} parent=1 // pred_region
      %s127 = ssub.s32 128, 128
      %128 = vsyncadd [#allocation11], %s127
      %s130 = sshll.u32 [#allocation12], 4
      %s131 = int_to_ptr.vmem [resolvable:$true] %s130
      %133 = dma.vmem_to_hbm [thread:$0]  %s131, 128, %s7, [#allocation11]
    $region45: #{tpu_custom_call.1} parent=1 // pred_fallthru
      _
    // Predicated region
    $region46: #{tpu_custom_call.1} parent=1 // pred_check
      _
    $region47: #{tpu_custom_call.1} parent=1 // pred_check_branch
      %135 = sbr.rel (0) target = $region49
    $region48: #{tpu_custom_call.1} parent=1 // pred_region
      %s137 = ssub.s32 128, 128
      %138 = vsyncadd [#allocation14], %s137
      %s140 = sshll.u32 [#allocation13], 4
      %s141 = int_to_ptr.vmem [resolvable:$true] %s140
      %143 = dma.vmem_to_hbm [thread:$0]  %s141, 128, %s8, [#allocation14]
    $region49: #{tpu_custom_call.1} parent=1 // pred_fallthru
      _
    // Predicated region
    $region50: #{tpu_custom_call.1} parent=1 // pred_check
      _
    $region51: #{tpu_custom_call.1} parent=1 // pred_check_branch
      %145 = sbr.rel (0) target = $region53
    $region52: #{tpu_custom_call.1} parent=1 // pred_region
      %146 = dma.done [#allocation5], 128
    $region53: #{tpu_custom_call.1} parent=1 // pred_fallthru
      _
    // Predicated region
    $region54: #{tpu_custom_call.1} parent=1 // pred_check
      _
    $region55: #{tpu_custom_call.1} parent=1 // pred_check_branch
      %148 = sbr.rel (0) target = $region57
    $region56: #{tpu_custom_call.1} parent=1 // pred_region
      %149 = dma.done [#allocation11], 128
    $region57: #{tpu_custom_call.1} parent=1 // pred_fallthru
      _
    // Predicated region
    $region58: #{tpu_custom_call.1} parent=1 // pred_check
      _
    $region59: #{tpu_custom_call.1} parent=1 // pred_check_branch
      %151 = sbr.rel (0) target = $region61
    $region60: #{tpu_custom_call.1} parent=1 // pred_region
      %152 = dma.done [#allocation11], 128
    $region61: #{tpu_custom_call.1} parent=1 // pred_fallthru
      _
    // Predicated region
    $region62: #{tpu_custom_call.1} parent=1 // pred_check
      _
    $region63: #{tpu_custom_call.1} parent=1 // pred_check_branch
      %154 = sbr.rel (0) target = $region65
    $region64: #{tpu_custom_call.1} parent=1 // pred_region
      %155 = dma.done [#allocation14], 128
    $region65: #{tpu_custom_call.1} parent=1 // pred_fallthru
      _
    %156 = vsyncpa [#allocation4], 1
    %157 = vsyncpa [#allocation7], 1
    %158 = vsyncpa [#allocation5], 1
    %159 = vsyncpa [#allocation11], 1
    %160 = vsyncpa [#allocation14], 1

</llo_original>
